<compile_context>
chip_gen: v6e
topology: v6e:2x2x1
jax: 0.10.0
libtpu: 0.0.40
codegen_flags: <defaults>
</compile_context>

<pallas_src>
import jax
import jax.numpy as jnp
from jax.experimental import pallas as pl
from jax.experimental.pallas import tpu as pltpu

HIDDEN = 200  # fixed by the module definition (nn.Linear(input_size, 200))


def _round_up(n: int, m: int) -> int:
    return ((n + m - 1) // m) * m


def _critic_kernel(x_ref, w1_ref, b1_ref, w2_ref, b2_ref, o_ref):
    # fc1 on the MXU: cast x to bf16 in-kernel (VPU, hidden under the DMA),
    # bf16 weights, f32 accumulation.
    x_bf = x_ref[...].astype(jnp.bfloat16)
    h = jnp.dot(x_bf, w1_ref[...], preferred_element_type=jnp.float32)
    h = jnp.maximum(h + b1_ref[...], 0.0)  # f32 bias + ReLU on the VPU
    # Value head: VPU multiply with the (1, H) weight row + XLU lane reduction.
    v = jnp.sum(h * w2_ref[...], axis=-1, keepdims=True) + b2_ref[0]  # (tb, 1)
    # Lane-dense store: one XLU transpose of the column -> (1, tb) row.
    o_ref[...] = v.T.astype(o_ref.dtype)


def _pick_batch_tile(B: int, tb_max: int) -> int:
    if B <= 128:
        # Single tile; output lane dim equals the full output dim, so any
        # multiple of 8 is layout-legal.
        return _round_up(B, 8)
    # >= 2 grid steps (v7x megacore) and tb % 128 == 0 so the lane-dense
    # (1, tb) output block satisfies the (8, 128) layout constraint.
    half = _round_up((B + 1) // 2, 128)
    return min(_round_up(tb_max, 128), half)


def critic_forward(x, w1, b1, w2, b2, *, tb_max: int = 512):
    """Forward pass of Critic.

    x : (B, D) float (f32 or bf16) — batch-major input
    w1: (D, H) — fc1 weight, stored transposed vs PyTorch, ideally bf16
    b1: (1, H)
    w2: (1, H) — output-head weight as a row (PyTorch-native (out=1, in=H))
    b2: (1, 1)
    returns (B, 1) float32
    """
    B, D = x.shape
    H = w1.shape[1]
    assert w1.shape == (D, H)
    assert b1.shape == (1, H)
    assert w2.shape == (1, H)
    assert b2.shape == (1, 1)

    if w1.dtype != jnp.bfloat16:
        # Prefer storing/carrying w1 in bf16 (see init_critic_params): this
        # fallback costs an extra HBM pass over w1 on every call.
        w1 = w1.astype(jnp.bfloat16)
    b1 = b1.astype(jnp.float32)
    w2 = w2.astype(jnp.float32)
    b2_s = b2.astype(jnp.float32).reshape((1,))  # scalar, lives in SMEM

    tb = _pick_batch_tile(B, tb_max)
    n_tiles = pl.cdiv(B, tb)
    b_pad = n_tiles * tb
    # NOTE: no jnp.pad of x — Pallas masks the ragged last input tile; the
    # garbage tail values are discarded by the [:B] slice below.

    out = pl.pallas_call(
        _critic_kernel,
        out_shape=jax.ShapeDtypeStruct((1, b_pad), jnp.float32),
        grid_spec=pltpu.PrefetchScalarGridSpec(
            num_scalar_prefetch=0,
            grid=(n_tiles,),
            in_specs=[
                # x: batch-tiled, double-buffered by the pipeline (DMA of tile
                # i+1 overlaps the fc1 matmul of tile i).
                pl.BlockSpec((tb, D), lambda i: (i, 0)),
                # Weights/biases: constant block index -> fetched once and
                # VMEM-resident; Buffered(1) drops the useless second buffer.
                pl.BlockSpec((D, H), lambda i: (0, 0),
                             pipeline_mode=pl.Buffered(1)),
                pl.BlockSpec((1, H), lambda i: (0, 0),
                             pipeline_mode=pl.Buffered(1)),
                pl.BlockSpec((1, H), lambda i: (0, 0),
                             pipeline_mode=pl.Buffered(1)),
                # b2: single scalar via SMEM (no VMEM tile / DMA for 4 bytes).
                pl.BlockSpec(memory_space=pltpu.MemorySpace.SMEM),
            ],
            # Lane-dense output: each step writes a (1, tb) row.
            out_specs=pl.BlockSpec((1, tb), lambda i: (0, i)),
        ),
        compiler_params=pltpu.CompilerParams(
            # Batch tiles are independent -> shard across TCs on v7x megacore.
            dimension_semantics=("parallel",),
            vmem_limit_bytes=48 * 1024 * 1024,
        ),
    )(x, w1, b1, w2, b2_s)

    # (1, b_pad) row of values -> (B, 1) column (drops ragged-tail garbage).
    return out.reshape(b_pad, 1)[:B]


def init_critic_params(key, input_size, hidden=HIDDEN):
    """PyTorch nn.Linear default init: U[-1/sqrt(fan_in), 1/sqrt(fan_in)].

    w1 is returned in bf16 (MXU-native storage dtype) so the forward pass
    never has to recast it; everything else stays f32.
    """
    k1, k2, k3, k4 = jax.random.split(key, 4)
    bound1 = 1.0 / jnp.sqrt(jnp.float32(input_size))
    bound2 = 1.0 / jnp.sqrt(jnp.float32(hidden))
    w1 = jax.random.uniform(k1, (input_size, hidden), jnp.float32, -bound1, bound1)
    b1 = jax.random.uniform(k2, (1, hidden), jnp.float32, -bound1, bound1)
    w2 = jax.random.uniform(k3, (1, hidden), jnp.float32, -bound2, bound2)
    b2 = jax.random.uniform(k4, (1, 1), jnp.float32, -bound2, bound2)
    return w1.astype(jnp.bfloat16), b1, w2, b2


def critic_reference(x, w1, b1, w2, b2):
    h = jnp.maximum(x @ w1.astype(jnp.float32) + b1, 0.0)
    return h @ w2.T + b2


if __name__ == "__main__":
    key = jax.random.PRNGKey(0)
    kx, kp = jax.random.split(key)

    INPUT_SIZE = 128   # small; real pong uses 80*80 = 6400
    w1, b1, w2, b2 = init_critic_params(kp, INPUT_SIZE)

    # Main run: B=256 -> tb=128, grid=(2,)  (exercises batch tiling, megacore
    # sharding, Buffered(1) weights and the lane-dense output path).
    B = 256
    x = jax.random.normal(kx, (B, INPUT_SIZE), jnp.float32)
    value = jax.block_until_ready(critic_forward(x, w1, b1, w2, b2))
    ref = critic_reference(x, w1, b1, w2, b2)
    assert value.shape == (B, 1)
    # bf16 fc1 operands vs f32 reference -> loosened tolerance.
    assert jnp.allclose(value, ref, atol=1e-2, rtol=1e-2), "mismatch vs JAX reference"

    # Ragged batch: exercises the masked partial last tile (no jnp.pad of x).
    B2 = 200
    x2 = jax.random.normal(jax.random.PRNGKey(7), (B2, INPUT_SIZE), jnp.float32)
    value2 = jax.block_until_ready(critic_forward(x2, w1, b1, w2, b2))
    ref2 = critic_reference(x2, w1, b1, w2, b2)
    assert value2.shape == (B2, 1)
    assert jnp.allclose(value2, ref2, atol=1e-2, rtol=1e-2), "mismatch (ragged batch)"

    # Tiny batch: single-tile path (grid=(1,), out lane dim == full dim).
    B3 = 32
    x3 = jax.random.normal(jax.random.PRNGKey(11), (B3, INPUT_SIZE), jnp.float32)
    value3 = jax.block_until_ready(critic_forward(x3, w1, b1, w2, b2))
    ref3 = critic_reference(x3, w1, b1, w2, b2)
    assert value3.shape == (B3, 1)
    assert jnp.allclose(value3, ref3, atol=1e-2, rtol=1e-2), "mismatch (tiny batch)"

    print("KERNEL_OK")
</pallas_src>

<mosaic_0001>
module attributes {stable_mosaic.version = 11 : i64} {
  func.func @_critic_kernel(%arg0: i32, %arg1: memref<128x128xf32, #tpu.memory_space<vmem>>, %arg2: memref<128x200xbf16, #tpu.memory_space<vmem>>, %arg3: memref<1x200xf32, #tpu.memory_space<vmem>>, %arg4: memref<1x200xf32, #tpu.memory_space<vmem>>, %arg5: memref<1xf32, #tpu.memory_space<smem>>, %arg6: memref<1x128xf32, #tpu.memory_space<vmem>>) attributes {dimension_semantics = [#tpu.dimension_semantics<parallel>], iteration_bounds = array<i64: 2>, scalar_prefetch = 0 : i64, scratch_operands = 0 : i64, tpu.core_type = #tpu.core_type<tc>, window_params = [{transform_indices = @transform_0, window_bounds = array<i64: 128, 128>}, {pipeline_mode = #tpu.pipeline_mode<synchronous>, transform_indices = @transform_1, window_bounds = array<i64: 128, 200>}, {pipeline_mode = #tpu.pipeline_mode<synchronous>, transform_indices = @transform_2, window_bounds = array<i64: 1, 200>}, {pipeline_mode = #tpu.pipeline_mode<synchronous>, transform_indices = @transform_3, window_bounds = array<i64: 1, 200>}, {transform_indices = @transform_4, window_bounds = array<i64: 1>}, {transform_indices = @transform_5, window_bounds = array<i64: 1, 128>}]} {
    %c0 = arith.constant 0 : index
    %c0_0 = arith.constant 0 : index
    %0 = vector.load %arg1[%c0, %c0_0] : memref<128x128xf32, #tpu.memory_space<vmem>>, vector<128x128xf32>
    %1 = arith.truncf %0 : vector<128x128xf32> to vector<128x128xbf16>
    %c0_1 = arith.constant 0 : index
    %c0_2 = arith.constant 0 : index
    %2 = vector.load %arg2[%c0_1, %c0_2] : memref<128x200xbf16, #tpu.memory_space<vmem>>, vector<128x200xbf16>
    %cst = arith.constant dense<0.000000e+00> : vector<128x200xf32>
    %3 = tpu.matmul %1, %2, %cst {dimension_numbers = #tpu.dot_dimension_numbers<[1], [0], [0], [1], [0, 0, 1, 1], [], []>} : vector<128x128xbf16>, vector<128x200xbf16>, vector<128x200xf32> -> vector<128x200xf32>
    %c0_3 = arith.constant 0 : index
    %c0_4 = arith.constant 0 : index
    %4 = vector.load %arg3[%c0_3, %c0_4] : memref<1x200xf32, #tpu.memory_space<vmem>>, vector<1x200xf32>
    %5 = vector.broadcast %4 : vector<1x200xf32> to vector<128x200xf32>
    %6 = arith.addf %3, %5 : vector<128x200xf32>
    %cst_5 = arith.constant 0.000000e+00 : f32
    %7 = vector.broadcast %cst_5 : f32 to vector<128x200xf32>
    %8 = arith.maximumf %6, %7 : vector<128x200xf32>
    %c0_6 = arith.constant 0 : index
    %c0_7 = arith.constant 0 : index
    %9 = vector.load %arg4[%c0_6, %c0_7] : memref<1x200xf32, #tpu.memory_space<vmem>>, vector<1x200xf32>
    %10 = vector.broadcast %9 : vector<1x200xf32> to vector<128x200xf32>
    %11 = arith.mulf %8, %10 : vector<128x200xf32>
    %cst_8 = arith.constant dense<0.000000e+00> : vector<128xf32>
    %12 = vector.multi_reduction <add>, %11, %cst_8 [1] : vector<128x200xf32> to vector<128xf32>
    %13 = vector.shape_cast %12 : vector<128xf32> to vector<128x1xf32>
    %c0_9 = arith.constant 0 : index
    %14 = memref.load %arg5[%c0_9] : memref<1xf32, #tpu.memory_space<smem>>
    %15 = vector.broadcast %14 : f32 to vector<128x1xf32>
    %16 = arith.addf %13, %15 : vector<128x1xf32>
    %17 = tpu.transpose %16, [1, 0] : vector<128x1xf32> -> vector<1x128xf32>
    %c0_10 = arith.constant 0 : index
    %c0_11 = arith.constant 0 : index
    %18 = vector.load %arg6[%c0_10, %c0_11] : memref<1x128xf32, #tpu.memory_space<vmem>>, vector<1x128xf32>
    tpu.vector_store %arg6[%c0_10, %c0_11], %17 {strides = array<i32>} : memref<1x128xf32, #tpu.memory_space<vmem>>, vector<1x128xf32>,
    return
  }
  func.func @transform_0(%arg0: i32) -> (i32, i32) {
    %c0_i32 = arith.constant 0 : i32
    %c0_i32_0 = arith.constant 0 : i32
    return %arg0, %c0_i32 : i32, i32
  }
  func.func @transform_1(%arg0: i32) -> (i32, i32) {
    %c0_i32 = arith.constant 0 : i32
    %c0_i32_0 = arith.constant 0 : i32
    %c0_i32_1 = arith.constant 0 : i32
    return %c0_i32, %c0_i32_0 : i32, i32
  }
  func.func @transform_2(%arg0: i32) -> (i32, i32) {
    %c0_i32 = arith.constant 0 : i32
    %c0_i32_0 = arith.constant 0 : i32
    %c0_i32_1 = arith.constant 0 : i32
    return %c0_i32, %c0_i32_0 : i32, i32
  }
  func.func @transform_3(%arg0: i32) -> (i32, i32) {
    %c0_i32 = arith.constant 0 : i32
    %c0_i32_0 = arith.constant 0 : i32
    %c0_i32_1 = arith.constant 0 : i32
    return %c0_i32, %c0_i32_0 : i32, i32
  }
  func.func @transform_4(%arg0: i32) -> i32 {
    %c0_i32 = arith.constant 0 : i32
    %c0_i32_0 = arith.constant 0 : i32
    return %c0_i32 : i32
  }
  func.func @transform_5(%arg0: i32) -> (i32, i32) {
    %c0_i32 = arith.constant 0 : i32
    %c0_i32_0 = arith.constant 0 : i32
    return %c0_i32, %arg0 : i32, i32
  }
}

</mosaic_0001>

<llo_original>
// kernel: tpu_custom_call.1
$region0: #{tpu_custom_call.1}
  #allocation0 [shape = 'u32[]', space=smem, size = 0x4, offset = 0x4, fixed_abs, tag = 'smem constant byte address 0x4 - core index']
  #allocation1 [shape = 'u32[144,128]{1,0:T(1,128)}', space=vmem, size = 0x12000, scoped, tag = 'internal scratch']
  #allocation2 [shape = 'f32[1]{0:T(128)S(6)}', space=smem, size = 0x200, scoped, tag = 'scoped memory for tpu_custom_call.1']
  %s0 = inlined_call_operand.hbm [shape: f32[256,128], index: 0, kind: input, shape index: {}]
  %s1 = inlined_call_operand.vmem [shape: bf16[128,200], index: 1, kind: input, shape index: {}]
  %s2 = inlined_call_operand.vmem [shape: f32[1,200], index: 2, kind: input, shape index: {}]
  %s3 = inlined_call_operand.vmem [shape: f32[1,200], index: 3, kind: input, shape index: {}]
  %s4 = inlined_call_operand.<no memory space> [shape: f32[1], index: 4, kind: input, shape index: {}]
  %s5 = inlined_call_operand.hbm [shape: f32[1,256], index: 5, kind: output, shape index: {}]
  %s6 = sld [smem:[#allocation0]]
  $region57: #{tpu_custom_call.1} parent=0
    _
  %s8 = ssub.s32 1, %s6
  %s9 = scalar_select 0, %s8, %s6
  %10 = sst [smem:[#allocation2]] %s4
  $region1: #{tpu_custom_call.1} parent=0
    #allocation3 [shape = 'u8[131072]{0}', space=vmem, size = 0x20000, scoped, tag = 'input window, operand 0']
    #allocation4 [shape = 's32[2]{0}', space=sflag, size = 0x8, scoped, tag = 'scoped memory for tpu_custom_call.1']
    #allocation5 [shape = 's32[2]{0}', space=sflag, size = 0x8, scoped, tag = 'scoped memory for tpu_custom_call.1']
    #allocation6 [shape = 'u8[1024]{0}', space=vmem, size = 0x400, scoped, tag = 'output window, operand 0']
    %11 = vsyncpa [#allocation4], 0
    %s12 = scalar_lea.sflag [#allocation4], 1
    %13 = vsyncpa %s12, 0
    %14 = vsyncpa [#allocation5], 0
    %s15 = scalar_lea.sflag [#allocation5], 1
    %16 = vsyncpa %s15, 0
    loop: start=0, step=1, limit=4
    $region2: #{tpu_custom_call.1} parent=1 // loop_pre_header
      _
    $region3: #{tpu_custom_call.1} parent=1 // loop_header
      %s18 = sphi 0, %s22
      %p19 = scmp.ge.s32.totalorder %s18, 4
      %s28 = sphi 0, %s30
      %s31 = sphi 0, %s28
      %s32 = sphi 0, %s31
      %s48 = sphi 0, %s32
      %s52 = sphi 0, %s52
      %s54 = sphi 0, %s52
      %s55 = sphi 0, %s54
      %s69 = sphi 0, %s55
      %s73 = sphi 0, %s73
      %s75 = sphi 0, %s73
      %s76 = sphi 0, %s75
      %s90 = sphi 0, %s76
      %s94 = sphi 0, %s94
      %s96 = sphi 0, %s94
      %s97 = sphi 0, %s96
      %s111 = sphi 0, %s97
      %s115 = sphi 0, %s115
      %s117 = sphi 0, %s115
      %s118 = sphi 0, %s117
      %s132 = sphi 0, %s118
      %s138 = sphi 0, %s140
      %s141 = sphi 0, %s138
      %s142 = sphi 0, %s141
      %s158 = sphi 0, %s142
    $region4: #{tpu_custom_call.1} parent=1 // loop_header_branch
      %21 = sbr.rel (%p19) target = $region8
    $region5: #{tpu_custom_call.1} parent=1 // loop_body
      %s23 = ssub.s32 %s18, 1
      %s24 = ssub.s32 %s18, 2
      %s25 = sadd.s32 %s18, 1
      %s26 = ssub.s32 %s18, %s25
      %p27 = scmp.eq.s32.totalorder %s26, 0
      %s29 = sadd.s32 %s28, 1
      %s30 = scalar_select %p27, %s28, %s29
      %p33 = pneg %p27
      %p34 = scmp.eq.s32.totalorder %s18, 1
      %p35 = por %p33, %p34
      %p36 = scmp.ne.s32.totalorder %s28, %s31
      %p37 = scmp.eq.s32.totalorder %s18, 0
      %p38 = por %p36, %p37
      %p39 = scmp.ne.s32.totalorder %s28, %s31
      %p40 = scmp.eq.s32.totalorder %s23, 1
      %p41 = por %p39, %p40
      %p42 = scmp.ne.s32.totalorder %s31, %s32
      %p43 = scmp.eq.s32.totalorder %s23, 0
      %p44 = por %p42, %p43
      %p45 = scmp.ne.s32.totalorder %s31, %s32
      %p46 = scmp.eq.s32.totalorder %s24, 1
      %p47 = por %p45, %p46
      %p49 = scmp.ne.s32.totalorder %s32, %s48
      %p50 = scmp.eq.s32.totalorder %s24, 0
      %p51 = por %p49, %p50
      %s53 = sadd.s32 %s52, 1
      %p56 = scmp.eq.s32.totalorder %s18, 1
      %p57 = scmp.ne.s32.totalorder %s52, %s54
      %p58 = scmp.eq.s32.totalorder %s18, 0
      %p59 = por %p57, %p58
      %p60 = scmp.ne.s32.totalorder %s52, %s54
      %p61 = scmp.eq.s32.totalorder %s23, 1
      %p62 = por %p60, %p61
      %p63 = scmp.ne.s32.totalorder %s54, %s55
      %p64 = scmp.eq.s32.totalorder %s23, 0
      %p65 = por %p63, %p64
      %p66 = scmp.ne.s32.totalorder %s54, %s55
      %p67 = scmp.eq.s32.totalorder %s24, 1
      %p68 = por %p66, %p67
      %p70 = scmp.ne.s32.totalorder %s55, %s69
      %p71 = scmp.eq.s32.totalorder %s24, 0
      %p72 = por %p70, %p71
      %s74 = sadd.s32 %s73, 1
      %p77 = scmp.eq.s32.totalorder %s18, 1
      %p78 = scmp.ne.s32.totalorder %s73, %s75
      %p79 = scmp.eq.s32.totalorder %s18, 0
      %p80 = por %p78, %p79
      %p81 = scmp.ne.s32.totalorder %s73, %s75
      %p82 = scmp.eq.s32.totalorder %s23, 1
      %p83 = por %p81, %p82
      %p84 = scmp.ne.s32.totalorder %s75, %s76
      %p85 = scmp.eq.s32.totalorder %s23, 0
      %p86 = por %p84, %p85
      %p87 = scmp.ne.s32.totalorder %s75, %s76
      %p88 = scmp.eq.s32.totalorder %s24, 1
      %p89 = por %p87, %p88
      %p91 = scmp.ne.s32.totalorder %s76, %s90
      %p92 = scmp.eq.s32.totalorder %s24, 0
      %p93 = por %p91, %p92
      %s95 = sadd.s32 %s94, 1
      %p98 = scmp.eq.s32.totalorder %s18, 1
      %p99 = scmp.ne.s32.totalorder %s94, %s96
      %p100 = scmp.eq.s32.totalorder %s18, 0
      %p101 = por %p99, %p100
      %p102 = scmp.ne.s32.totalorder %s94, %s96
      %p103 = scmp.eq.s32.totalorder %s23, 1
      %p104 = por %p102, %p103
      %p105 = scmp.ne.s32.totalorder %s96, %s97
      %p106 = scmp.eq.s32.totalorder %s23, 0
      %p107 = por %p105, %p106
      %p108 = scmp.ne.s32.totalorder %s96, %s97
      %p109 = scmp.eq.s32.totalorder %s24, 1
      %p110 = por %p108, %p109
      %p112 = scmp.ne.s32.totalorder %s97, %s111
      %p113 = scmp.eq.s32.totalorder %s24, 0
      %p114 = por %p112, %p113
      %s116 = sadd.s32 %s115, 1
      %p119 = scmp.eq.s32.totalorder %s18, 1
      %p120 = scmp.ne.s32.totalorder %s115, %s117
      %p121 = scmp.eq.s32.totalorder %s18, 0
      %p122 = por %p120, %p121
      %p123 = scmp.ne.s32.totalorder %s115, %s117
      %p124 = scmp.eq.s32.totalorder %s23, 1
      %p125 = por %p123, %p124
      %p126 = scmp.ne.s32.totalorder %s117, %s118
      %p127 = scmp.eq.s32.totalorder %s23, 0
      %p128 = por %p126, %p127
      %p129 = scmp.ne.s32.totalorder %s117, %s118
      %p130 = scmp.eq.s32.totalorder %s24, 1
      %p131 = por %p129, %p130
      %p133 = scmp.ne.s32.totalorder %s118, %s132
      %p134 = scmp.eq.s32.totalorder %s24, 0
      %p135 = por %p133, %p134
      %s136 = ssub.s32 %s18, %s25
      %p137 = scmp.eq.s32.totalorder %s136, 0
      %s139 = sadd.s32 %s138, 1
      %s140 = scalar_select %p137, %s138, %s139
      %p143 = pneg %p137
      %p144 = scmp.eq.s32.totalorder %s18, 1
      %p145 = por %p143, %p144
      %p146 = scmp.ne.s32.totalorder %s138, %s141
      %p147 = scmp.eq.s32.totalorder %s18, 0
      %p148 = por %p146, %p147
      %p149 = scmp.ne.s32.totalorder %s138, %s141
      %p150 = scmp.eq.s32.totalorder %s23, 1
      %p151 = por %p149, %p150
      %p152 = scmp.ne.s32.totalorder %s141, %s142
      %p153 = scmp.eq.s32.totalorder %s23, 0
      %p154 = por %p152, %p153
      %p155 = scmp.ne.s32.totalorder %s141, %s142
      %p156 = scmp.eq.s32.totalorder %s24, 1
      %p157 = por %p155, %p156
      %p159 = scmp.ne.s32.totalorder %s142, %s158
      %p160 = scmp.eq.s32.totalorder %s24, 0
      %p161 = por %p159, %p160
      %p162 = scmp.le.s32.totalorder 1, %s18
      %p163 = scmp.lt.s32.totalorder %s18, 3
      %p164 = pnand %p162, %p163
      %p165 = pneg %p164
      // Predicated region
      $region9: #{tpu_custom_call.1} parent=5 // pred_check
        _
      $region10: #{tpu_custom_call.1} parent=5 // pred_check_branch
        %167 = sbr.rel (%p164) target = $region12
      $region11: #{tpu_custom_call.1} parent=5 // pred_region
        %s168 = ssub.s32 %s18, 1
        // Predicated region
        $region13: #{tpu_custom_call.1} parent=11 // pred_check
          %p169 = pneg %p65
        $region14: #{tpu_custom_call.1} parent=11 // pred_check_branch
          %171 = sbr.rel (%p169) target = $region16
        $region15: #{tpu_custom_call.1} parent=11 // pred_region
          _
        $region16: #{tpu_custom_call.1} parent=11 // pred_fallthru
          _
        // Predicated region
        $region17: #{tpu_custom_call.1} parent=11 // pred_check
          %p172 = pneg %p86
        $region18: #{tpu_custom_call.1} parent=11 // pred_check_branch
          %174 = sbr.rel (%p172) target = $region20
        $region19: #{tpu_custom_call.1} parent=11 // pred_region
          _
        $region20: #{tpu_custom_call.1} parent=11 // pred_fallthru
          _
        // Predicated region
        $region21: #{tpu_custom_call.1} parent=11 // pred_check
          %p175 = pneg %p107
        $region22: #{tpu_custom_call.1} parent=11 // pred_check_branch
          %177 = sbr.rel (%p175) target = $region24
        $region23: #{tpu_custom_call.1} parent=11 // pred_region
          _
        $region24: #{tpu_custom_call.1} parent=11 // pred_fallthru
          _
        // Predicated region
        $region25: #{tpu_custom_call.1} parent=11 // pred_check
          %p178 = pneg %p128
        $region26: #{tpu_custom_call.1} parent=11 // pred_check_branch
          %180 = sbr.rel (%p178) target = $region28
        $region27: #{tpu_custom_call.1} parent=11 // pred_region
          _
        $region28: #{tpu_custom_call.1} parent=11 // pred_fallthru
          _
      $region12: #{tpu_custom_call.1} parent=5 // pred_fallthru
        _
      %p181 = scmp.lt.s32.totalorder %s18, 2
      // Predicated region
      $region29: #{tpu_custom_call.1} parent=5 // pred_check
        %p182 = pneg %p181
      $region30: #{tpu_custom_call.1} parent=5 // pred_check_branch
        %184 = sbr.rel (%p182) target = $region32
      $region31: #{tpu_custom_call.1} parent=5 // pred_region
        // Predicated region
        $region33: #{tpu_custom_call.1} parent=31 // pred_check
          %p185 = pneg %p38
        $region34: #{tpu_custom_call.1} parent=31 // pred_check_branch
          %187 = sbr.rel (%p185) target = $region36
        $region35: #{tpu_custom_call.1} parent=31 // pred_region
          %s188 = sand.u32 %s28, 1
          %s189 = scalar_lea.sflag [#allocation4], %s188
          %s190 = sand.u32 %s28, 1
          %s191 = smul.addr %s190, 128
          %s192 = scalar_lea.vmem [#allocation3], %s191
          %s193 = smul.u32 16, %s18
          %s195 = ssub.s32 2048, 2048
          %196 = vsyncadd %s189, %s195
          %s197 = smul.addr %s193, 128
          %s198 = scalar_lea.hbm %s0, %s197
          %s199 = sshll.u32 %s192, 4
          %s200 = int_to_ptr.vmem [resolvable:$true] %s199
          %205 = dma.hbm_to_vmem [thread:$0]  %s198, 2048, %s200, %s189, 128, 128, 8
        $region36: #{tpu_custom_call.1} parent=31 // pred_fallthru
          _
      $region32: #{tpu_custom_call.1} parent=5 // pred_fallthru
        _
      %p206 = scmp.le.s32.totalorder 1, %s18
      %p207 = scmp.lt.s32.totalorder %s18, 3
      %p208 = pnand %p206, %p207
      %p209 = pneg %p208
      // Predicated region
      $region37: #{tpu_custom_call.1} parent=5 // pred_check
        _
      $region38: #{tpu_custom_call.1} parent=5 // pred_check_branch
        %211 = sbr.rel (%p208) target = $region40
      $region39: #{tpu_custom_call.1} parent=5 // pred_region
        %s212 = ssub.s32 %s18, 1
        %s213 = sand.u32 %s31, 1
        %s214 = scalar_lea.sflag [#allocation4], %s213
        %s215 = sand.u32 %s31, 1
        %s216 = smul.addr %s215, 128
        %s217 = scalar_lea.vmem [#allocation3], %s216
        // Predicated region
        $region41: #{tpu_custom_call.1} parent=39 // pred_check
          %p218 = pneg %p44
        $region42: #{tpu_custom_call.1} parent=39 // pred_check_branch
          %220 = sbr.rel (%p218) target = $region44
        $region43: #{tpu_custom_call.1} parent=39 // pred_region
          %221 = dma.done %s214, 2048
        $region44: #{tpu_custom_call.1} parent=39 // pred_fallthru
          _
        %s222 = sand.u32 %s31, 1
        %s223 = scalar_lea.sflag [#allocation4], %s222
        %s224 = sand.u32 %s31, 1
        %s225 = smul.addr %s224, 128
        %s226 = scalar_lea.vmem [#allocation3], %s225
        %p227 = pneg %p44
        %p228 = pneg %p41
        %p229 = pneg %p65
        %p230 = pneg %p62
        %p231 = pneg %p86
        %p232 = pneg %p83
        %p233 = pneg %p107
        %p234 = pneg %p104
        %p235 = pneg %p128
        %p236 = pneg %p125
        %p237 = pneg %p154
        %p238 = pneg %p151
        %s239 = sand.u32 %s141, 1
        %s240 = scalar_lea.sflag [#allocation5], %s239
        %s241 = sand.u32 %s141, 1
        %s242 = scalar_lea.vmem [#allocation6], %s241
        %s243 = smul.u32 16, %s23
        %v245 = vld [vmem:[%s217] sm:$0xff]
        %v246 = vld [vmem:[%s217 + $0x8] sm:$0xff]
        %v247 = vld [vmem:[%s217 + $0x10] sm:$0xff]
        %v248 = vld [vmem:[%s217 + $0x18] sm:$0xff]
        %v249 = vld [vmem:[%s217 + $0x20] sm:$0xff]
        %v250 = vld [vmem:[%s217 + $0x28] sm:$0xff]
        %v251 = vld [vmem:[%s217 + $0x30] sm:$0xff]
        %v252 = vld [vmem:[%s217 + $0x38] sm:$0xff]
        %v253 = vld [vmem:[%s217 + $0x40] sm:$0xff]
        %v254 = vld [vmem:[%s217 + $0x48] sm:$0xff]
        %v255 = vld [vmem:[%s217 + $0x50] sm:$0xff]
        %v256 = vld [vmem:[%s217 + $0x58] sm:$0xff]
        %v257 = vld [vmem:[%s217 + $0x60] sm:$0xff]
        %v258 = vld [vmem:[%s217 + $0x68] sm:$0xff]
        %v259 = vld [vmem:[%s217 + $0x70] sm:$0xff]
        %v260 = vld [vmem:[%s217 + $0x78] sm:$0xff]
        %v261 = vpack.c.bf16 %v246, %v245
        %v262 = vpack.c.bf16 %v248, %v247
        %v263 = vpack.c.bf16 %v250, %v249
        %v264 = vpack.c.bf16 %v252, %v251
        %v265 = vpack.c.bf16 %v254, %v253
        %v266 = vpack.c.bf16 %v256, %v255
        %v267 = vpack.c.bf16 %v258, %v257
        %v268 = vpack.c.bf16 %v260, %v259
        %v269 = vld [vmem:[%s1] sm:$0xff]
        %v270 = vld [vmem:[%s1 + $0x8] sm:$0xff]
        %v271 = vld [vmem:[%s1 + $0x10] sm:$0xff]
        %v272 = vld [vmem:[%s1 + $0x18] sm:$0xff]
        %v273 = vld [vmem:[%s1 + $0x20] sm:$0xff]
        %v274 = vld [vmem:[%s1 + $0x28] sm:$0xff]
        %v275 = vld [vmem:[%s1 + $0x30] sm:$0xff]
        %v276 = vld [vmem:[%s1 + $0x38] sm:$0xff]
        %v277 = vld [vmem:[%s1 + $0x40] sm:$0xff]
        %v278 = vld [vmem:[%s1 + $0x48] sm:$0xff]
        %v279 = vld [vmem:[%s1 + $0x50] sm:$0xff]
        %v280 = vld [vmem:[%s1 + $0x58] sm:$0xff]
        %v281 = vld [vmem:[%s1 + $0x60] sm:$0xff]
        %v282 = vld [vmem:[%s1 + $0x68] sm:$0xff]
        %v283 = vld [vmem:[%s1 + $0x70] sm:$0xff]
        %v284 = vld [vmem:[%s1 + $0x78] sm:$0xff]
        %v285 = vld [vmem:[%s2] sm:$0x3]
        %v287 = vlaneseq
        %v288 = vshrl.u32 %v287, 7
        %v289 = vsub.s32 0, %v288
        %v290 = vrot.slane %v285, %v289
        %v291 = vlaneseq
        %v292 = vshrl.u32 %v291, 7
        %v293 = vsub.s32 1, %v292
        %v294 = vrot.slane %v285, %v293
        %v313 = vunpack.c.l.b16 %v269
        %v314 = vunpack.c.h.b16 %v269
        %v315 = vunpack.c.l.b16 %v270
        %v316 = vunpack.c.h.b16 %v270
        %v317 = vunpack.c.l.b16 %v271
        %v318 = vunpack.c.h.b16 %v271
        %v319 = vunpack.c.l.b16 %v272
        %v320 = vunpack.c.h.b16 %v272
        %v321 = vunpack.c.l.b16 %v273
        %v322 = vunpack.c.h.b16 %v273
        %v323 = vunpack.c.l.b16 %v274
        %v324 = vunpack.c.h.b16 %v274
        %v325 = vunpack.c.l.b16 %v275
        %v326 = vunpack.c.h.b16 %v275
        %v327 = vunpack.c.l.b16 %v276
        %v328 = vunpack.c.h.b16 %v276
        %v329 = vunpack.c.l.b16 %v277
        %v330 = vunpack.c.h.b16 %v277
        %v331 = vunpack.c.l.b16 %v278
        %v332 = vunpack.c.h.b16 %v278
        %v333 = vunpack.c.l.b16 %v279
        %v334 = vunpack.c.h.b16 %v279
        %v335 = vunpack.c.l.b16 %v280
        %v336 = vunpack.c.h.b16 %v280
        %v337 = vunpack.c.l.b16 %v281
        %v338 = vunpack.c.h.b16 %v281
        %v339 = vunpack.c.l.b16 %v282
        %v340 = vunpack.c.h.b16 %v282
        %v341 = vunpack.c.l.b16 %v283
        %v342 = vunpack.c.h.b16 %v283
        %v343 = vunpack.c.l.b16 %v284
        %v344 = vunpack.c.h.b16 %v284
        %v345 = vpack.c.b16 %v315, %v313
        %v346 = vpack.c.b16 %v316, %v314
        %v347 = vpack.c.b16 %v319, %v317
        %v348 = vpack.c.b16 %v320, %v318
        %v349 = vpack.c.b16 %v323, %v321
        %v350 = vpack.c.b16 %v324, %v322
        %v351 = vpack.c.b16 %v327, %v325
        %v352 = vpack.c.b16 %v328, %v326
        %v353 = vpack.c.b16 %v331, %v329
        %v354 = vpack.c.b16 %v332, %v330
        %v355 = vpack.c.b16 %v335, %v333
        %v356 = vpack.c.b16 %v336, %v334
        %v357 = vpack.c.b16 %v339, %v337
        %v358 = vpack.c.b16 %v340, %v338
        %v359 = vpack.c.b16 %v343, %v341
        %v360 = vpack.c.b16 %v344, %v342
        %377 = vmatprep.subr.bf16.mxu0 %v360
        %378 = vmatpush1.bf16.msra.mxu0 %v359
        %379 = vmatprep.subr.bf16.mxu0 %v358
        %380 = vmatpush1.bf16.msra.mxu0 %v357
        %381 = vmatprep.subr.bf16.mxu0 %v356
        %382 = vmatpush1.bf16.msra.mxu0 %v355
        %383 = vmatprep.subr.bf16.mxu0 %v354
        %384 = vmatpush1.bf16.msra.mxu0 %v353
        %385 = vmatprep.subr.bf16.mxu0 %v352
        %386 = vmatpush1.bf16.msra.mxu0 %v351
        %387 = vmatprep.subr.bf16.mxu0 %v350
        %388 = vmatpush1.bf16.msra.mxu0 %v349
        %389 = vmatprep.subr.bf16.mxu0 %v348
        %390 = vmatpush1.bf16.msra.mxu0 %v347
        %391 = vmatprep.subr.bf16.mxu0 %v346
        %392 = vmatpush1.bf16.msra.mxu0 %v345
        %393 = vmatprep.subr.bf16.mxu0 0
        %394 = vmatpush2.bf16.msra.mxu0 0
        %395 = vmatprep.subr.bf16.mxu0 0
        %396 = vmatpush2.bf16.msra.mxu0 0
        %397 = vmatprep.subr.bf16.mxu0 0
        %398 = vmatpush2.bf16.msra.mxu0 0
        %399 = vmatprep.subr.bf16.mxu0 0
        %400 = vmatpush2.bf16.msra.mxu0 0
        %401 = vmatprep.subr.bf16.mxu0 0
        %402 = vmatpush2.bf16.msra.mxu0 0
        %403 = vmatprep.subr.bf16.mxu0 0
        %404 = vmatpush2.bf16.msra.mxu0 0
        %405 = vmatprep.subr.bf16.mxu0 0
        %406 = vmatpush2.bf16.msra.mxu0 0
        %407 = vmatprep.subr.bf16.mxu0 0
        %408 = vmatpush2.bf16.msra.mxu0 0
        %409 = vmatprep.mubr.bf16.mxu0 0
        %410 = vmatmul.mubr.bf16.gmra.mxu0 %v261
        %v411 = vpop.f32.mrf.mxu0
        %v412 = vadd.f32 %v290, %v411
        %v413 = vpop.f32.mrf.mxu0
        %v414 = vadd.f32 %v294, %v413
        %v415 = vpop.f32.mrf.mxu0
        %v416 = vadd.f32 %v290, %v415
        %v417 = vpop.f32.mrf.mxu0
        %v418 = vadd.f32 %v294, %v417
        %419 = vmatprep.mubr.bf16.mxu0 0
        %420 = vmatmul.mubr.bf16.gmra.mxu0 %v262
        %v421 = vpop.f32.mrf.mxu0
        %v422 = vadd.f32 %v290, %v421
        %v423 = vpop.f32.mrf.mxu0
        %v424 = vadd.f32 %v294, %v423
        %v425 = vpop.f32.mrf.mxu0
        %v426 = vadd.f32 %v290, %v425
        %v427 = vpop.f32.mrf.mxu0
        %v428 = vadd.f32 %v294, %v427
        %429 = vmatprep.mubr.bf16.mxu0 0
        %430 = vmatmul.mubr.bf16.gmra.mxu0 %v263
        %v431 = vpop.f32.mrf.mxu0
        %v432 = vadd.f32 %v290, %v431
        %v433 = vpop.f32.mrf.mxu0
        %v434 = vadd.f32 %v294, %v433
        %v435 = vpop.f32.mrf.mxu0
        %v436 = vadd.f32 %v290, %v435
        %v437 = vpop.f32.mrf.mxu0
        %v438 = vadd.f32 %v294, %v437
        %439 = vmatprep.mubr.bf16.mxu0 0
        %440 = vmatmul.mubr.bf16.gmra.mxu0 %v264
        %v441 = vpop.f32.mrf.mxu0
        %v442 = vadd.f32 %v290, %v441
        %v443 = vpop.f32.mrf.mxu0
        %v444 = vadd.f32 %v294, %v443
        %v445 = vpop.f32.mrf.mxu0
        %v446 = vadd.f32 %v290, %v445
        %v447 = vpop.f32.mrf.mxu0
        %v448 = vadd.f32 %v294, %v447
        %449 = vmatprep.mubr.bf16.mxu0 0
        %450 = vmatmul.mubr.bf16.gmra.mxu0 %v265
        %v451 = vpop.f32.mrf.mxu0
        %v452 = vadd.f32 %v290, %v451
        %v453 = vpop.f32.mrf.mxu0
        %v454 = vadd.f32 %v294, %v453
        %v455 = vpop.f32.mrf.mxu0
        %v456 = vadd.f32 %v290, %v455
        %v457 = vpop.f32.mrf.mxu0
        %v458 = vadd.f32 %v294, %v457
        %459 = vmatprep.mubr.bf16.mxu0 0
        %460 = vmatmul.mubr.bf16.gmra.mxu0 %v266
        %v461 = vpop.f32.mrf.mxu0
        %v462 = vadd.f32 %v290, %v461
        %v463 = vpop.f32.mrf.mxu0
        %v464 = vadd.f32 %v294, %v463
        %v465 = vpop.f32.mrf.mxu0
        %v466 = vadd.f32 %v290, %v465
        %v467 = vpop.f32.mrf.mxu0
        %v468 = vadd.f32 %v294, %v467
        %469 = vmatprep.mubr.bf16.mxu0 0
        %470 = vmatmul.mubr.bf16.gmra.mxu0 %v267
        %v471 = vpop.f32.mrf.mxu0
        %v472 = vadd.f32 %v290, %v471
        %v473 = vpop.f32.mrf.mxu0
        %v474 = vadd.f32 %v294, %v473
        %v475 = vpop.f32.mrf.mxu0
        %v476 = vadd.f32 %v290, %v475
        %v477 = vpop.f32.mrf.mxu0
        %v478 = vadd.f32 %v294, %v477
        %479 = vmatprep.mubr.bf16.mxu0 0
        %480 = vmatmul.mubr.bf16.gmra.mxu0 %v268
        %v481 = vpop.f32.mrf.mxu0
        %v482 = vadd.f32 %v290, %v481
        %v483 = vpop.f32.mrf.mxu0
        %v484 = vadd.f32 %v294, %v483
        %v485 = vpop.f32.mrf.mxu0
        %v486 = vadd.f32 %v290, %v485
        %v487 = vpop.f32.mrf.mxu0
        %v488 = vadd.f32 %v294, %v487
        %489 = vdwg.mxu0
        %v490 = vmax.f32 %v412, 0.0
        %v491 = vmax.f32 %v414, 0.0
        %v492 = vmax.f32 %v416, 0.0
        %v493 = vmax.f32 %v418, 0.0
        %v494 = vmax.f32 %v422, 0.0
        %v495 = vmax.f32 %v424, 0.0
        %v496 = vmax.f32 %v426, 0.0
        %v497 = vmax.f32 %v428, 0.0
        %v498 = vmax.f32 %v432, 0.0
        %v499 = vmax.f32 %v434, 0.0
        %v500 = vmax.f32 %v436, 0.0
        %v501 = vmax.f32 %v438, 0.0
        %v502 = vmax.f32 %v442, 0.0
        %v503 = vmax.f32 %v444, 0.0
        %v504 = vmax.f32 %v446, 0.0
        %v505 = vmax.f32 %v448, 0.0
        %v506 = vmax.f32 %v452, 0.0
        %v507 = vmax.f32 %v454, 0.0
        %v508 = vmax.f32 %v456, 0.0
        %v509 = vmax.f32 %v458, 0.0
        %v510 = vmax.f32 %v462, 0.0
        %v511 = vmax.f32 %v464, 0.0
        %v512 = vmax.f32 %v466, 0.0
        %v513 = vmax.f32 %v468, 0.0
        %v514 = vmax.f32 %v472, 0.0
        %v515 = vmax.f32 %v474, 0.0
        %v516 = vmax.f32 %v476, 0.0
        %v517 = vmax.f32 %v478, 0.0
        %v518 = vmax.f32 %v482, 0.0
        %v519 = vmax.f32 %v484, 0.0
        %v520 = vmax.f32 %v486, 0.0
        %v521 = vmax.f32 %v488, 0.0
        %v522 = vld [vmem:[%s3] sm:$0x3]
        %v524 = vlaneseq
        %v525 = vshrl.u32 %v524, 7
        %v526 = vsub.s32 0, %v525
        %v527 = vrot.slane %v522, %v526
        %v528 = vlaneseq
        %v529 = vshrl.u32 %v528, 7
        %v530 = vsub.s32 1, %v529
        %v531 = vrot.slane %v522, %v530
        %v534 = vmul.f32 %v490, %v527
        %v535 = vmul.f32 %v491, %v531
        %v536 = vmul.f32 %v492, %v527
        %v537 = vmul.f32 %v493, %v531
        %v538 = vmul.f32 %v494, %v527
        %v539 = vmul.f32 %v495, %v531
        %v540 = vmul.f32 %v496, %v527
        %v541 = vmul.f32 %v497, %v531
        %v542 = vmul.f32 %v498, %v527
        %v543 = vmul.f32 %v499, %v531
        %v544 = vmul.f32 %v500, %v527
        %v545 = vmul.f32 %v501, %v531
        %v546 = vmul.f32 %v502, %v527
        %v547 = vmul.f32 %v503, %v531
        %v548 = vmul.f32 %v504, %v527
        %v549 = vmul.f32 %v505, %v531
        %v550 = vmul.f32 %v506, %v527
        %v551 = vmul.f32 %v507, %v531
        %v552 = vmul.f32 %v508, %v527
        %v553 = vmul.f32 %v509, %v531
        %v554 = vmul.f32 %v510, %v527
        %v555 = vmul.f32 %v511, %v531
        %v556 = vmul.f32 %v512, %v527
        %v557 = vmul.f32 %v513, %v531
        %v558 = vmul.f32 %v514, %v527
        %v559 = vmul.f32 %v515, %v531
        %v560 = vmul.f32 %v516, %v527
        %v561 = vmul.f32 %v517, %v531
        %v562 = vmul.f32 %v518, %v527
        %v563 = vmul.f32 %v519, %v531
        %v564 = vmul.f32 %v520, %v527
        %v565 = vmul.f32 %v521, %v531
        %vm566 = vcmask 588800
        %v567 = vsel %vm566, %v535, 0.0
        %v568 = vadd.f32 %v534, %v567
        %569 = vadd.xlane.f32.xlu0 %v568
        %v570 = vpop.xlane.xlu0 %569
        %v571 = vsel %vm566, %v537, 0.0
        %v572 = vadd.f32 %v536, %v571
        %573 = vadd.xlane.f32.xlu0 %v572
        %v574 = vpop.xlane.xlu0 %573
        %v575 = vsel %vm566, %v539, 0.0
        %v576 = vadd.f32 %v538, %v575
        %577 = vadd.xlane.f32.xlu0 %v576
        %v578 = vpop.xlane.xlu0 %577
        %v579 = vsel %vm566, %v541, 0.0
        %v580 = vadd.f32 %v540, %v579
        %581 = vadd.xlane.f32.xlu0 %v580
        %v582 = vpop.xlane.xlu0 %581
        %v583 = vsel %vm566, %v543, 0.0
        %v584 = vadd.f32 %v542, %v583
        %585 = vadd.xlane.f32.xlu0 %v584
        %v586 = vpop.xlane.xlu0 %585
        %v587 = vsel %vm566, %v545, 0.0
        %v588 = vadd.f32 %v544, %v587
        %589 = vadd.xlane.f32.xlu0 %v588
        %v590 = vpop.xlane.xlu0 %589
        %v591 = vsel %vm566, %v547, 0.0
        %v592 = vadd.f32 %v546, %v591
        %593 = vadd.xlane.f32.xlu0 %v592
        %v594 = vpop.xlane.xlu0 %593
        %v595 = vsel %vm566, %v549, 0.0
        %v596 = vadd.f32 %v548, %v595
        %597 = vadd.xlane.f32.xlu0 %v596
        %v598 = vpop.xlane.xlu0 %597
        %v599 = vsel %vm566, %v551, 0.0
        %v600 = vadd.f32 %v550, %v599
        %601 = vadd.xlane.f32.xlu0 %v600
        %v602 = vpop.xlane.xlu0 %601
        %v603 = vsel %vm566, %v553, 0.0
        %v604 = vadd.f32 %v552, %v603
        %605 = vadd.xlane.f32.xlu0 %v604
        %v606 = vpop.xlane.xlu0 %605
        %v607 = vsel %vm566, %v555, 0.0
        %v608 = vadd.f32 %v554, %v607
        %609 = vadd.xlane.f32.xlu0 %v608
        %v610 = vpop.xlane.xlu0 %609
        %v611 = vsel %vm566, %v557, 0.0
        %v612 = vadd.f32 %v556, %v611
        %613 = vadd.xlane.f32.xlu0 %v612
        %v614 = vpop.xlane.xlu0 %613
        %v615 = vsel %vm566, %v559, 0.0
        %v616 = vadd.f32 %v558, %v615
        %617 = vadd.xlane.f32.xlu0 %v616
        %v618 = vpop.xlane.xlu0 %617
        %v619 = vsel %vm566, %v561, 0.0
        %v620 = vadd.f32 %v560, %v619
        %621 = vadd.xlane.f32.xlu0 %v620
        %v622 = vpop.xlane.xlu0 %621
        %v623 = vsel %vm566, %v563, 0.0
        %v624 = vadd.f32 %v562, %v623
        %625 = vadd.xlane.f32.xlu0 %v624
        %v626 = vpop.xlane.xlu0 %625
        %v627 = vsel %vm566, %v565, 0.0
        %v628 = vadd.f32 %v564, %v627
        %629 = vadd.xlane.f32.xlu0 %v628
        %v630 = vpop.xlane.xlu0 %629
        %s631 = sld [smem:[#allocation2]]
        %v632 = vstv %s631
        %v633 = vadd.f32 %v570, %v632
        %v634 = vadd.f32 %v574, %v632
        %v635 = vadd.f32 %v578, %v632
        %v636 = vadd.f32 %v582, %v632
        %v637 = vadd.f32 %v586, %v632
        %v638 = vadd.f32 %v590, %v632
        %v639 = vadd.f32 %v594, %v632
        %v640 = vadd.f32 %v598, %v632
        %v641 = vadd.f32 %v602, %v632
        %v642 = vadd.f32 %v606, %v632
        %v643 = vadd.f32 %v610, %v632
        %v644 = vadd.f32 %v614, %v632
        %v645 = vadd.f32 %v618, %v632
        %v646 = vadd.f32 %v622, %v632
        %v647 = vadd.f32 %v626, %v632
        %v648 = vadd.f32 %v630, %v632
        %649 = vxpose.xlu0.b32.start [1/16] %v633, 128
        %650 = vxpose.xlu0.b32.cont [2/16] %v634, 128
        %651 = vxpose.xlu0.b32.cont [3/16] %v635, 128
        %652 = vxpose.xlu0.b32.cont [4/16] %v636, 128
        %653 = vxpose.xlu0.b32.cont [5/16] %v637, 128
        %654 = vxpose.xlu0.b32.cont [6/16] %v638, 128
        %655 = vxpose.xlu0.b32.cont [7/16] %v639, 128
        %656 = vxpose.xlu0.b32.cont [8/16] %v640, 128
        %657 = vxpose.xlu0.b32.cont [9/16] %v641, 128
        %658 = vxpose.xlu0.b32.cont [10/16] %v642, 128
        %659 = vxpose.xlu0.b32.cont [11/16] %v643, 128
        %660 = vxpose.xlu0.b32.cont [12/16] %v644, 128
        %661 = vxpose.xlu0.b32.cont [13/16] %v645, 128
        %662 = vxpose.xlu0.b32.cont [14/16] %v646, 128
        %663 = vxpose.xlu0.b32.cont [15/16] %v647, 128
        %664 = vxpose.xlu0.b32.end [16/16] %v648, 128
        %v665 = vpop.trf.xlu0
        %v666 = vpop.trf.xlu0
        %v667 = vpop.trf.xlu0
        %v668 = vpop.trf.xlu0
        %v669 = vpop.trf.xlu0
        %v670 = vpop.trf.xlu0
        %v671 = vpop.trf.xlu0
        %v672 = vpop.trf.xlu0
        %v673 = vpop.trf.xlu0
        %v674 = vpop.trf.xlu0
        %v675 = vpop.trf.xlu0
        %v676 = vpop.trf.xlu0
        %v677 = vpop.trf.xlu0
        %v678 = vpop.trf.xlu0
        %v679 = vpop.trf.xlu0
        %v680 = vpop.trf.xlu0
        %681 = vst [vmem:[%s242] sm:$0x1] %v665
        %s682 = sand.u32 %s141, 1
        %s683 = scalar_lea.sflag [#allocation5], %s682
        %s684 = sand.u32 %s141, 1
        %s685 = scalar_lea.vmem [#allocation6], %s684
        // Predicated region
        $region45: #{tpu_custom_call.1} parent=39 // pred_check
          %p686 = pneg %p151
        $region46: #{tpu_custom_call.1} parent=39 // pred_check_branch
          %688 = sbr.rel (%p686) target = $region48
        $region47: #{tpu_custom_call.1} parent=39 // pred_region
          %s690 = ssub.s32 16, 16
          %691 = vsyncadd %s683, %s690
          %s692 = smul.addr %s23, 16
          %s693 = scalar_lea.hbm %s5, %s692
          %s695 = sshll.u32 %s685, 4
          %s696 = int_to_ptr.vmem [resolvable:$true] %s695
          %698 = dma.vmem_to_hbm [thread:$0]  %s696, 16, %s693, %s683
        $region48: #{tpu_custom_call.1} parent=39 // pred_fallthru
          _
      $region40: #{tpu_custom_call.1} parent=5 // pred_fallthru
        _
      %p699 = scmp.le.s32.totalorder 2, %s18
      // Predicated region
      $region49: #{tpu_custom_call.1} parent=5 // pred_check
        %p700 = pneg %p699
      $region50: #{tpu_custom_call.1} parent=5 // pred_check_branch
        %702 = sbr.rel (%p700) target = $region52
      $region51: #{tpu_custom_call.1} parent=5 // pred_region
        %s703 = ssub.s32 %s18, 2
        // Predicated region
        $region53: #{tpu_custom_call.1} parent=51 // pred_check
          %p704 = pneg %p157
        $region54: #{tpu_custom_call.1} parent=51 // pred_check_branch
          %706 = sbr.rel (%p704) target = $region56
        $region55: #{tpu_custom_call.1} parent=51 // pred_region
          %s707 = sand.u32 %s142, 1
          %s708 = scalar_lea.sflag [#allocation5], %s707
          %s709 = sand.u32 %s142, 1
          %s710 = scalar_lea.vmem [#allocation6], %s709
          %711 = dma.done %s708, 16
        $region56: #{tpu_custom_call.1} parent=51 // pred_fallthru
          _
      $region52: #{tpu_custom_call.1} parent=5 // pred_fallthru
        _
    $region6: #{tpu_custom_call.1} parent=1 // loop_footer
      %s22 = sadd.s32 1, %s18
    $region7: #{tpu_custom_call.1} parent=1 // loop_footer_branch
      %17 = sbr.rel target = $region3
    $region8: #{tpu_custom_call.1} parent=1 // loop_exit
      _
    %712 = vsyncpa [#allocation4], 1
    %s713 = scalar_lea.sflag [#allocation4], 1
    %714 = vsyncpa %s713, 1
    %715 = vsyncpa [#allocation5], 1
    %s716 = scalar_lea.sflag [#allocation5], 1
    %717 = vsyncpa %s716, 1

</llo_original>
